<compile_context>
chip_gen: v7x
topology: tpu7x:2x2x1
jax: 0.10.0
libtpu: 0.0.40
codegen_flags: <defaults>
</compile_context>

<pallas_src>
import functools
import math

import jax
import jax.numpy as jnp
from jax.experimental import pallas as pl
from jax.experimental.pallas import tpu as pltpu


def _group_scaling_kernel(x_ref, pool_ref, expand_ref, o_ref, *, eps):
    """y = x * rsqrt(mean(x^2 over contiguous cg-lane group) + eps).

    pool_ref:   (lanes, n_groups) with 1/cg where lane//cg == group, else 0.
    expand_ref: (n_groups, lanes) 0/1 indicator (transpose of the support).
    """
    x = x_ref[...].astype(jnp.float32)
    # Compact per-group second moment on the MXU (full f32 precision).
    m2 = jnp.dot(x * x, pool_ref[...],
                 preferred_element_type=jnp.float32,
                 precision=jax.lax.Precision.HIGHEST)          # (rows, n_g)
    inv = jax.lax.rsqrt(m2 + eps)                              # one EUP op/group
    # Broadcast the per-group scale back to full lane width (exact: 0/1 matrix
    # at HIGHEST), then a single lane-dense multiply + store.
    scale = jnp.dot(inv, expand_ref[...],
                    preferred_element_type=jnp.float32,
                    precision=jax.lax.Precision.HIGHEST)       # (rows, lanes)
    o_ref[...] = (x * scale).astype(o_ref.dtype)


def _sublane_multiple(dtype):
    itemsize = jnp.dtype(dtype).itemsize
    if itemsize >= 4:
        return 8
    if itemsize == 2:
        return 16
    return 32


def _round_up(a, b):
    return -(-a // b) * b


def _tpu_vmem_capacity_bytes():
    try:
        return int(pltpu.get_tpu_info().vmem_capacity_bytes)
    except Exception:
        return 128 << 20  # v5e / v6e default


def group_scaling_1d(x, *, eps=1e-5, group_num=4, row_tile=None):
    """GroupScaling1D forward.  x: (T, B, C) -> (T, B, C)."""
    T, B, C = x.shape
    assert C % group_num == 0, "C must be divisible by group_num"
    cg = C // group_num
    n_rows = T * B
    itemsize = jnp.dtype(x.dtype).itemsize
    sub = _sublane_multiple(x.dtype)

    # ---- lane packing: make the last dim a multiple of 128 when possible ----
    if C % 128 == 0:
        lanes, k = C, 1
    else:
        lanes = C * 128 // math.gcd(C, 128)   # lcm(C, 128)
        k = lanes // C
        if lanes > 2048:                      # pathological C: keep lanes = C
            lanes, k = C, 1
    n_g = lanes // cg                         # groups per physical row (= k*group_num)

    x2d = x.reshape(n_rows, C)
    rem = n_rows % k
    if rem:
        # Tiny tail pad (<= k-1 rows) just so packing divides evenly.  Zero rows
        # normalize to zero (eps > 0) and are sliced off afterwards.
        x2d = jnp.pad(x2d, ((0, k - rem), (0, 0)))
    packed_rows = x2d.shape[0] // k
    xp = x2d.reshape(packed_rows, lanes) if k > 1 else x2d

    # ---- generation-aware tile sizing ----
    vmem_cap = _tpu_vmem_capacity_bytes()
    small_vmem = vmem_cap <= (64 << 20)       # v7x-class: 64 MiB VMEM, 2 TCs/chip
    vmem_budget = (30 << 20) if small_vmem else (56 << 20)
    vmem_limit = (40 << 20) if small_vmem else (72 << 20)
    tile_target = (6 << 20) if small_vmem else (12 << 20)

    if row_tile is None:
        # 2x(in + out) double buffers in native dtype + ~3 f32 temporaries.
        per_row_bytes = lanes * (4 * itemsize + 3 * 4)
        row_tile = min(tile_target // (lanes * itemsize),
                       vmem_budget // per_row_bytes)
    row_tile = max(sub, (int(row_tile) // sub) * sub)

    # On dual-TensorCore chips keep >= 2 grid steps so the "parallel" axis can
    # shard across both cores; v5e/v6e are single-TC so a single block is fine.
    min_blocks = 2 if (small_vmem and packed_rows >= 2 * sub) else 1
    row_tile = min(row_tile, _round_up(pl.cdiv(packed_rows, min_blocks), sub))
    row_tile = max(sub, row_tile)
    if row_tile >= packed_rows:
        row_tile = packed_rows                # single full-extent block
    grid_n = pl.cdiv(packed_rows, row_tile)   # partial last block handled by Pallas

    # ---- constant pool / indicator matrices (built once, resident in VMEM) ----
    gid = jnp.arange(lanes, dtype=jnp.int32) // cg
    onehot = (gid[:, None] == jnp.arange(n_g, dtype=jnp.int32)[None, :])
    pool = onehot.astype(jnp.float32) * jnp.float32(1.0 / cg)   # (lanes, n_g)
    expand = onehot.astype(jnp.float32).T                       # (n_g, lanes)

    kernel = functools.partial(_group_scaling_kernel, eps=eps)

    # TODO(synk): if profiling shows exposed input DMA on tiny-compute cases,
    # try pipeline_mode=pl.Buffered(3) on the x BlockSpec.
    out = pl.pallas_call(
        kernel,
        out_shape=jax.ShapeDtypeStruct((packed_rows, lanes), x.dtype),
        grid_spec=pl.GridSpec(
            grid=(grid_n,),
            in_specs=[
                pl.BlockSpec((row_tile, lanes), lambda i: (i, 0)),
                pl.BlockSpec((lanes, n_g), lambda i: (0, 0)),   # resident constant
                pl.BlockSpec((n_g, lanes), lambda i: (0, 0)),   # resident constant
            ],
            out_specs=pl.BlockSpec((row_tile, lanes), lambda i: (i, 0)),
        ),
        compiler_params=pltpu.CompilerParams(
            dimension_semantics=("parallel",),
            vmem_limit_bytes=int(vmem_limit),
        ),
    )(xp, pool, expand)

    if k > 1:
        out = out.reshape(packed_rows * k, C)
    if rem:
        out = out[:n_rows]
    return out.reshape(T, B, C)


def _reference(x, eps=1e-5, group_num=4):
    T, B, C = x.shape
    cg = C // group_num
    g = x.reshape(T, B, group_num, cg).astype(jnp.float32)
    m2 = jnp.mean(g * g, axis=3, keepdims=True)
    m2 = jnp.broadcast_to(m2, (T, B, group_num, cg)).reshape(T, B, C)
    return (x.astype(jnp.float32) / jnp.sqrt(m2 + eps)).astype(x.dtype)


if __name__ == "__main__":
    # Case 1: small C -> lane-packed path (C=32 folds k=4 rows into 128 lanes).
    T, B, C = 8, 2, 32
    x = jax.random.normal(jax.random.PRNGKey(0), (T, B, C), dtype=jnp.float32)
    out = jax.block_until_ready(group_scaling_1d(x, eps=1e-5, group_num=4))
    ref = _reference(x, eps=1e-5, group_num=4)
    assert out.shape == (T, B, C)
    assert jnp.allclose(out, ref, atol=1e-5, rtol=1e-5)

    # Case 2: C multiple of 128 -> direct path, multi-tile grid with a partial
    # last block (39 rows, row_tile=16 -> 16 + 16 + 7).
    T2, B2, C2 = 13, 3, 256
    x2 = jax.random.normal(jax.random.PRNGKey(1), (T2, B2, C2), dtype=jnp.float32)
    out2 = jax.block_until_ready(
        group_scaling_1d(x2, eps=1e-5, group_num=4, row_tile=16))
    ref2 = _reference(x2, eps=1e-5, group_num=4)
    assert jnp.allclose(out2, ref2, atol=1e-5, rtol=1e-5)

    # Case 3: packed path with a row remainder (21 rows, k=2 -> 1 pad row) and
    # a partial last block (11 packed rows, row_tile=8 -> 8 + 3).
    T3, B3, C3 = 7, 3, 64
    x3 = jax.random.normal(jax.random.PRNGKey(2), (T3, B3, C3), dtype=jnp.float32)
    out3 = jax.block_until_ready(
        group_scaling_1d(x3, eps=1e-5, group_num=4, row_tile=8))
    ref3 = _reference(x3, eps=1e-5, group_num=4)
    assert jnp.allclose(out3, ref3, atol=1e-5, rtol=1e-5)

    print("KERNEL_OK")
</pallas_src>

<mosaic_0001>
module attributes {stable_mosaic.version = 11 : i64} {
  func.func @_group_scaling_kernel(%arg0: i32, %arg1: memref<4x128xf32, #tpu.memory_space<vmem>>, %arg2: memref<128x16xf32, #tpu.memory_space<vmem>>, %arg3: memref<16x128xf32, #tpu.memory_space<vmem>>, %arg4: memref<4x128xf32, #tpu.memory_space<vmem>>) attributes {dimension_semantics = [#tpu.dimension_semantics<parallel>], iteration_bounds = array<i64: 1>, scalar_prefetch = 0 : i64, scratch_operands = 0 : i64, tpu.core_type = #tpu.core_type<tc>, window_params = [{transform_indices = @transform_0, window_bounds = array<i64: 4, 128>}, {pipeline_mode = #tpu.pipeline_mode<synchronous>, transform_indices = @transform_1, window_bounds = array<i64: 128, 16>}, {pipeline_mode = #tpu.pipeline_mode<synchronous>, transform_indices = @transform_2, window_bounds = array<i64: 16, 128>}, {transform_indices = @transform_3, window_bounds = array<i64: 4, 128>}]} {
    %c0 = arith.constant 0 : index
    %c0_0 = arith.constant 0 : index
    %0 = vector.load %arg1[%c0, %c0_0] : memref<4x128xf32, #tpu.memory_space<vmem>>, vector<4x128xf32>
    %1 = arith.mulf %0, %0 : vector<4x128xf32>
    %c0_1 = arith.constant 0 : index
    %c0_2 = arith.constant 0 : index
    %2 = vector.load %arg2[%c0_1, %c0_2] : memref<128x16xf32, #tpu.memory_space<vmem>>, vector<128x16xf32>
    %cst = arith.constant dense<0.000000e+00> : vector<4x16xf32>
    %3 = tpu.matmul %1, %2, %cst {dimension_numbers = #tpu.dot_dimension_numbers<[1], [0], [0], [1], [0, 0, 1, 1], [], []>, precision = #tpu.contract_precision<fp32>} : vector<4x128xf32>, vector<128x16xf32>, vector<4x16xf32> -> vector<4x16xf32>
    %cst_3 = arith.constant 9.99999974E-6 : f32
    %4 = vector.broadcast %cst_3 : f32 to vector<4x16xf32>
    %5 = arith.addf %3, %4 : vector<4x16xf32>
    %6 = math.rsqrt %5 : vector<4x16xf32>
    %c0_4 = arith.constant 0 : index
    %c0_5 = arith.constant 0 : index
    %7 = vector.load %arg3[%c0_4, %c0_5] : memref<16x128xf32, #tpu.memory_space<vmem>>, vector<16x128xf32>
    %cst_6 = arith.constant dense<0.000000e+00> : vector<4x128xf32>
    %8 = tpu.matmul %6, %7, %cst_6 {dimension_numbers = #tpu.dot_dimension_numbers<[1], [0], [0], [1], [0, 0, 1, 1], [], []>, precision = #tpu.contract_precision<fp32>} : vector<4x16xf32>, vector<16x128xf32>, vector<4x128xf32> -> vector<4x128xf32>
    %9 = arith.mulf %0, %8 : vector<4x128xf32>
    %c0_7 = arith.constant 0 : index
    %c0_8 = arith.constant 0 : index
    %10 = vector.load %arg4[%c0_7, %c0_8] : memref<4x128xf32, #tpu.memory_space<vmem>>, vector<4x128xf32>
    tpu.vector_store %arg4[%c0_7, %c0_8], %9 {strides = array<i32>} : memref<4x128xf32, #tpu.memory_space<vmem>>, vector<4x128xf32>,
    return
  }
  func.func @transform_0(%arg0: i32) -> (i32, i32) {
    %c0_i32 = arith.constant 0 : i32
    %c0_i32_0 = arith.constant 0 : i32
    return %arg0, %c0_i32 : i32, i32
  }
  func.func @transform_1(%arg0: i32) -> (i32, i32) {
    %c0_i32 = arith.constant 0 : i32
    %c0_i32_0 = arith.constant 0 : i32
    %c0_i32_1 = arith.constant 0 : i32
    return %c0_i32, %c0_i32_0 : i32, i32
  }
  func.func @transform_2(%arg0: i32) -> (i32, i32) {
    %c0_i32 = arith.constant 0 : i32
    %c0_i32_0 = arith.constant 0 : i32
    %c0_i32_1 = arith.constant 0 : i32
    return %c0_i32, %c0_i32_0 : i32, i32
  }
  func.func @transform_3(%arg0: i32) -> (i32, i32) {
    %c0_i32 = arith.constant 0 : i32
    %c0_i32_0 = arith.constant 0 : i32
    return %arg0, %c0_i32 : i32, i32
  }
}

</mosaic_0001>

<llo_original>
// kernel: tpu_custom_call.1
$region0: #{tpu_custom_call.1}
  #allocation0 [shape = 'u32[]', space=smem, size = 0x4, offset = 0x4, fixed_abs, tag = 'smem constant byte address 0x4 - core index']
  #allocation1 [shape = 'u32[144,128]{1,0:T(1,128)}', space=vmem, size = 0x12000, scoped, tag = 'internal scratch']
  %s0 = inlined_call_operand.hbm [shape: f32[4,128], index: 0, kind: input, shape index: {}]
  %s1 = inlined_call_operand.hbm [shape: f32[128,16], index: 1, kind: input, shape index: {}]
  %s2 = inlined_call_operand.hbm [shape: f32[16,128], index: 2, kind: input, shape index: {}]
  %s3 = inlined_call_operand.hbm [shape: f32[4,128], index: 3, kind: output, shape index: {}]
  %s4 = sld [smem:[#allocation0]]
  $region34: #{tpu_custom_call.1} parent=0
    _
  %s6 = ssub.s32 1, %s4
  %s7 = scalar_select 0, %s6, %s4
  $region1: #{tpu_custom_call.1} parent=0
    #allocation2 [shape = 'u8[2048]{0}', space=vmem, size = 0x800, scoped, tag = 'input window, operand 0, single buffered']
    #allocation3 [shape = 's32[1]{0}', space=sflag, size = 0x4, scoped, tag = 'scoped memory for tpu_custom_call.1']
    #allocation4 [shape = 's32[1]{0}', space=sflag, size = 0x4, scoped, tag = 'scoped memory for tpu_custom_call.1']
    #allocation5 [shape = 'u8[65536]{0}', space=vmem, size = 0x10000, scoped, tag = 'input window, operand 1, single buffered']
    #allocation6 [shape = 's32[1]{0}', space=sflag, size = 0x4, scoped, tag = 'scoped memory for tpu_custom_call.1']
    #allocation7 [shape = 'u8[8192]{0}', space=vmem, size = 0x2000, scoped, tag = 'input window, operand 2, single buffered']
    #allocation8 [shape = 'u8[2048]{0}', space=vmem, size = 0x800, scoped, tag = 'output window, operand 0, single buffered']
    %8 = vsyncpa [#allocation3], 0
    %9 = vsyncpa [#allocation6], 0
    %10 = vsyncpa [#allocation4], 0
    // Predicated region
    $region2: #{tpu_custom_call.1} parent=1 // pred_check
      _
    $region3: #{tpu_custom_call.1} parent=1 // pred_check_branch
      %12 = sbr.rel (0) target = $region5
    $region4: #{tpu_custom_call.1} parent=1 // pred_region
      %s14 = ssub.s32 64, 64
      %15 = vsyncadd [#allocation3], %s14
      %s17 = sshll.u32 [#allocation2], 4
      %s18 = int_to_ptr.vmem [resolvable:$true] %s17
      %20 = dma.hbm_to_vmem [thread:$0]  %s0, 64, %s18, [#allocation3]
    $region5: #{tpu_custom_call.1} parent=1 // pred_fallthru
      _
    // Predicated region
    $region6: #{tpu_custom_call.1} parent=1 // pred_check
      _
    $region7: #{tpu_custom_call.1} parent=1 // pred_check_branch
      %22 = sbr.rel (0) target = $region9
    $region8: #{tpu_custom_call.1} parent=1 // pred_region
      %s24 = ssub.s32 2048, 2048
      %25 = vsyncadd [#allocation6], %s24
      %s26 = sshll.u32 [#allocation5], 4
      %s27 = int_to_ptr.vmem [resolvable:$true] %s26
      %32 = dma.hbm_to_vmem [thread:$0]  %s1, 2048, %s27, [#allocation6], 128, 128, 8
    $region9: #{tpu_custom_call.1} parent=1 // pred_fallthru
      _
    // Predicated region
    $region10: #{tpu_custom_call.1} parent=1 // pred_check
      _
    $region11: #{tpu_custom_call.1} parent=1 // pred_check_branch
      %34 = sbr.rel (0) target = $region13
    $region12: #{tpu_custom_call.1} parent=1 // pred_region
      %s36 = ssub.s32 256, 256
      %37 = vsyncadd [#allocation6], %s36
      %s38 = sshll.u32 [#allocation7], 4
      %s39 = int_to_ptr.vmem [resolvable:$true] %s38
      %44 = dma.hbm_to_vmem [thread:$0]  %s2, 256, %s39, [#allocation6], 128, 128, 8
    $region13: #{tpu_custom_call.1} parent=1 // pred_fallthru
      _
    // Predicated region
    $region14: #{tpu_custom_call.1} parent=1 // pred_check
      _
    $region15: #{tpu_custom_call.1} parent=1 // pred_check_branch
      %46 = sbr.rel (0) target = $region17
    $region16: #{tpu_custom_call.1} parent=1 // pred_region
      %47 = dma.done [#allocation3], 64
    $region17: #{tpu_custom_call.1} parent=1 // pred_fallthru
      _
    // Predicated region
    $region18: #{tpu_custom_call.1} parent=1 // pred_check
      _
    $region19: #{tpu_custom_call.1} parent=1 // pred_check_branch
      %49 = sbr.rel (0) target = $region21
    $region20: #{tpu_custom_call.1} parent=1 // pred_region
      %50 = dma.done [#allocation6], 2048
    $region21: #{tpu_custom_call.1} parent=1 // pred_fallthru
      _
    // Predicated region
    $region22: #{tpu_custom_call.1} parent=1 // pred_check
      _
    $region23: #{tpu_custom_call.1} parent=1 // pred_check_branch
      %52 = sbr.rel (0) target = $region25
    $region24: #{tpu_custom_call.1} parent=1 // pred_region
      %53 = dma.done [#allocation6], 256
    $region25: #{tpu_custom_call.1} parent=1 // pred_fallthru
      _
    %v54 = vld [vmem:[#allocation2] sm:$0xf]
    %v55 = vmul.f32 %v54, %v54
    %v56 = vld [vmem:[#allocation5] sm:$0xff]
    %v57 = vld [vmem:[#allocation5 + $0x8] sm:$0xff]
    %v58 = vld [vmem:[#allocation5 + $0x10] sm:$0xff]
    %v59 = vld [vmem:[#allocation5 + $0x18] sm:$0xff]
    %v60 = vld [vmem:[#allocation5 + $0x20] sm:$0xff]
    %v61 = vld [vmem:[#allocation5 + $0x28] sm:$0xff]
    %v62 = vld [vmem:[#allocation5 + $0x30] sm:$0xff]
    %v63 = vld [vmem:[#allocation5 + $0x38] sm:$0xff]
    %v64 = vld [vmem:[#allocation5 + $0x40] sm:$0xff]
    %v65 = vld [vmem:[#allocation5 + $0x48] sm:$0xff]
    %v66 = vld [vmem:[#allocation5 + $0x50] sm:$0xff]
    %v67 = vld [vmem:[#allocation5 + $0x58] sm:$0xff]
    %v68 = vld [vmem:[#allocation5 + $0x60] sm:$0xff]
    %v69 = vld [vmem:[#allocation5 + $0x68] sm:$0xff]
    %v70 = vld [vmem:[#allocation5 + $0x70] sm:$0xff]
    %v71 = vld [vmem:[#allocation5 + $0x78] sm:$0xff]
    %72 = vmatprep.subr.mxu0 0.0
    %v73 = vand.u32 %v56, 4294901760
    %74 = vmatpush1.msra.mxu0 %v73
    %75 = vmatprep.subr.mxu0 0.0
    %v76 = vand.u32 %v57, 4294901760
    %77 = vmatpush1.msra.mxu0 %v76
    %78 = vmatprep.subr.mxu0 0.0
    %v79 = vand.u32 %v58, 4294901760
    %80 = vmatpush1.msra.mxu0 %v79
    %81 = vmatprep.subr.mxu0 0.0
    %v82 = vand.u32 %v59, 4294901760
    %83 = vmatpush1.msra.mxu0 %v82
    %84 = vmatprep.subr.mxu0 0.0
    %v85 = vand.u32 %v60, 4294901760
    %86 = vmatpush1.msra.mxu0 %v85
    %87 = vmatprep.subr.mxu0 0.0
    %v88 = vand.u32 %v61, 4294901760
    %89 = vmatpush1.msra.mxu0 %v88
    %90 = vmatprep.subr.mxu0 0.0
    %v91 = vand.u32 %v62, 4294901760
    %92 = vmatpush1.msra.mxu0 %v91
    %93 = vmatprep.subr.mxu0 0.0
    %v94 = vand.u32 %v63, 4294901760
    %95 = vmatpush1.msra.mxu0 %v94
    %96 = vmatprep.subr.mxu0 0.0
    %v97 = vand.u32 %v64, 4294901760
    %98 = vmatpush1.msra.mxu0 %v97
    %99 = vmatprep.subr.mxu0 0.0
    %v100 = vand.u32 %v65, 4294901760
    %101 = vmatpush1.msra.mxu0 %v100
    %102 = vmatprep.subr.mxu0 0.0
    %v103 = vand.u32 %v66, 4294901760
    %104 = vmatpush1.msra.mxu0 %v103
    %105 = vmatprep.subr.mxu0 0.0
    %v106 = vand.u32 %v67, 4294901760
    %107 = vmatpush1.msra.mxu0 %v106
    %108 = vmatprep.subr.mxu0 0.0
    %v109 = vand.u32 %v68, 4294901760
    %110 = vmatpush1.msra.mxu0 %v109
    %111 = vmatprep.subr.mxu0 0.0
    %v112 = vand.u32 %v69, 4294901760
    %113 = vmatpush1.msra.mxu0 %v112
    %114 = vmatprep.subr.mxu0 0.0
    %v115 = vand.u32 %v70, 4294901760
    %116 = vmatpush1.msra.mxu0 %v115
    %117 = vmatprep.subr.mxu0 0.0
    %v118 = vand.u32 %v71, 4294901760
    %119 = vmatpush1.msra.mxu0 %v118
    %120 = vmatprep.subr.mxu0 0.0
    %121 = vmatpush1.msra.mxu0 0.0
    %122 = vmatprep.subr.mxu0 0.0
    %123 = vmatpush1.msra.mxu0 0.0
    %124 = vmatprep.subr.mxu0 0.0
    %125 = vmatpush1.msra.mxu0 0.0
    %126 = vmatprep.subr.mxu0 0.0
    %127 = vmatpush1.msra.mxu0 0.0
    %128 = vmatprep.subr.mxu0 0.0
    %129 = vmatpush1.msra.mxu0 0.0
    %130 = vmatprep.subr.mxu0 0.0
    %131 = vmatpush1.msra.mxu0 0.0
    %132 = vmatprep.subr.mxu0 0.0
    %133 = vmatpush1.msra.mxu0 0.0
    %134 = vmatprep.subr.mxu0 0.0
    %135 = vmatpush1.msra.mxu0 0.0
    %136 = vmatprep.subr.mxu0 0.0
    %137 = vmatpush1.msra.mxu0 0.0
    %138 = vmatprep.subr.mxu0 0.0
    %139 = vmatpush1.msra.mxu0 0.0
    %140 = vmatprep.subr.mxu0 0.0
    %141 = vmatpush1.msra.mxu0 0.0
    %142 = vmatprep.subr.mxu0 0.0
    %143 = vmatpush1.msra.mxu0 0.0
    %144 = vmatprep.subr.mxu0 0.0
    %145 = vmatpush1.msra.mxu0 0.0
    %146 = vmatprep.subr.mxu0 0.0
    %147 = vmatpush1.msra.mxu0 0.0
    %148 = vmatprep.subr.mxu0 0.0
    %149 = vmatpush1.msra.mxu0 0.0
    %150 = vmatprep.subr.mxu0 0.0
    %151 = vmatpush1.msra.mxu0 0.0
    %152 = vmatprep.mubr.f32.mxu0 0.0
    %v153 = vand.u32 %v55, 4294901760
    %v154 = vsub.f32 %v55, %v153
    %v155 = vand.u32 %v154, 4294901760
    %v156 = vsub.f32 %v154, %v155
    %v157 = vand.u32 %v156, 4294901760
    %158 = vmatmul.mubr.f32.gmra.mrb[0].mxu0 %v157
    %v159 = vpop.f32.mrb[0].mxu0
    %v160 = vadd.f32 1e-05, %v159
    %v161 = vpop.f32.mrb[0].mxu0
    %162 = vdwg.mxu0
    %163 = vmatprep.subr.mxu0 0.0
    %v164 = vand.u32 %v56, 4294901760
    %v165 = vsub.f32 %v56, %v164
    %v166 = vand.u32 %v165, 4294901760
    %v167 = vsub.f32 %v165, %v166
    %v168 = vand.u32 %v167, 4294901760
    %169 = vmatpush1.msra.mxu0 %v168
    %170 = vmatprep.subr.mxu0 0.0
    %v171 = vand.u32 %v57, 4294901760
    %v172 = vsub.f32 %v57, %v171
    %v173 = vand.u32 %v172, 4294901760
    %v174 = vsub.f32 %v172, %v173
    %v175 = vand.u32 %v174, 4294901760
    %176 = vmatpush1.msra.mxu0 %v175
    %177 = vmatprep.subr.mxu0 0.0
    %v178 = vand.u32 %v58, 4294901760
    %v179 = vsub.f32 %v58, %v178
    %v180 = vand.u32 %v179, 4294901760
    %v181 = vsub.f32 %v179, %v180
    %v182 = vand.u32 %v181, 4294901760
    %183 = vmatpush1.msra.mxu0 %v182
    %184 = vmatprep.subr.mxu0 0.0
    %v185 = vand.u32 %v59, 4294901760
    %v186 = vsub.f32 %v59, %v185
    %v187 = vand.u32 %v186, 4294901760
    %v188 = vsub.f32 %v186, %v187
    %v189 = vand.u32 %v188, 4294901760
    %190 = vmatpush1.msra.mxu0 %v189
    %191 = vmatprep.subr.mxu0 0.0
    %v192 = vand.u32 %v60, 4294901760
    %v193 = vsub.f32 %v60, %v192
    %v194 = vand.u32 %v193, 4294901760
    %v195 = vsub.f32 %v193, %v194
    %v196 = vand.u32 %v195, 4294901760
    %197 = vmatpush1.msra.mxu0 %v196
    %198 = vmatprep.subr.mxu0 0.0
    %v199 = vand.u32 %v61, 4294901760
    %v200 = vsub.f32 %v61, %v199
    %v201 = vand.u32 %v200, 4294901760
    %v202 = vsub.f32 %v200, %v201
    %v203 = vand.u32 %v202, 4294901760
    %204 = vmatpush1.msra.mxu0 %v203
    %205 = vmatprep.subr.mxu0 0.0
    %v206 = vand.u32 %v62, 4294901760
    %v207 = vsub.f32 %v62, %v206
    %v208 = vand.u32 %v207, 4294901760
    %v209 = vsub.f32 %v207, %v208
    %v210 = vand.u32 %v209, 4294901760
    %211 = vmatpush1.msra.mxu0 %v210
    %212 = vmatprep.subr.mxu0 0.0
    %v213 = vand.u32 %v63, 4294901760
    %v214 = vsub.f32 %v63, %v213
    %v215 = vand.u32 %v214, 4294901760
    %v216 = vsub.f32 %v214, %v215
    %v217 = vand.u32 %v216, 4294901760
    %218 = vmatpush1.msra.mxu0 %v217
    %219 = vmatprep.subr.mxu0 0.0
    %v220 = vand.u32 %v64, 4294901760
    %v221 = vsub.f32 %v64, %v220
    %v222 = vand.u32 %v221, 4294901760
    %v223 = vsub.f32 %v221, %v222
    %v224 = vand.u32 %v223, 4294901760
    %225 = vmatpush1.msra.mxu0 %v224
    %226 = vmatprep.subr.mxu0 0.0
    %v227 = vand.u32 %v65, 4294901760
    %v228 = vsub.f32 %v65, %v227
    %v229 = vand.u32 %v228, 4294901760
    %v230 = vsub.f32 %v228, %v229
    %v231 = vand.u32 %v230, 4294901760
    %232 = vmatpush1.msra.mxu0 %v231
    %233 = vmatprep.subr.mxu0 0.0
    %v234 = vand.u32 %v66, 4294901760
    %v235 = vsub.f32 %v66, %v234
    %v236 = vand.u32 %v235, 4294901760
    %v237 = vsub.f32 %v235, %v236
    %v238 = vand.u32 %v237, 4294901760
    %239 = vmatpush1.msra.mxu0 %v238
    %240 = vmatprep.subr.mxu0 0.0
    %v241 = vand.u32 %v67, 4294901760
    %v242 = vsub.f32 %v67, %v241
    %v243 = vand.u32 %v242, 4294901760
    %v244 = vsub.f32 %v242, %v243
    %v245 = vand.u32 %v244, 4294901760
    %246 = vmatpush1.msra.mxu0 %v245
    %247 = vmatprep.subr.mxu0 0.0
    %v248 = vand.u32 %v68, 4294901760
    %v249 = vsub.f32 %v68, %v248
    %v250 = vand.u32 %v249, 4294901760
    %v251 = vsub.f32 %v249, %v250
    %v252 = vand.u32 %v251, 4294901760
    %253 = vmatpush1.msra.mxu0 %v252
    %254 = vmatprep.subr.mxu0 0.0
    %v255 = vand.u32 %v69, 4294901760
    %v256 = vsub.f32 %v69, %v255
    %v257 = vand.u32 %v256, 4294901760
    %v258 = vsub.f32 %v256, %v257
    %v259 = vand.u32 %v258, 4294901760
    %260 = vmatpush1.msra.mxu0 %v259
    %261 = vmatprep.subr.mxu0 0.0
    %v262 = vand.u32 %v70, 4294901760
    %v263 = vsub.f32 %v70, %v262
    %v264 = vand.u32 %v263, 4294901760
    %v265 = vsub.f32 %v263, %v264
    %v266 = vand.u32 %v265, 4294901760
    %267 = vmatpush1.msra.mxu0 %v266
    %268 = vmatprep.subr.mxu0 0.0
    %v269 = vand.u32 %v71, 4294901760
    %v270 = vsub.f32 %v71, %v269
    %v271 = vand.u32 %v270, 4294901760
    %v272 = vsub.f32 %v270, %v271
    %v273 = vand.u32 %v272, 4294901760
    %274 = vmatpush1.msra.mxu0 %v273
    %275 = vmatprep.subr.mxu0 0.0
    %276 = vmatpush1.msra.mxu0 0.0
    %277 = vmatprep.subr.mxu0 0.0
    %278 = vmatpush1.msra.mxu0 0.0
    %279 = vmatprep.subr.mxu0 0.0
    %280 = vmatpush1.msra.mxu0 0.0
    %281 = vmatprep.subr.mxu0 0.0
    %282 = vmatpush1.msra.mxu0 0.0
    %283 = vmatprep.subr.mxu0 0.0
    %284 = vmatpush1.msra.mxu0 0.0
    %285 = vmatprep.subr.mxu0 0.0
    %286 = vmatpush1.msra.mxu0 0.0
    %287 = vmatprep.subr.mxu0 0.0
    %288 = vmatpush1.msra.mxu0 0.0
    %289 = vmatprep.subr.mxu0 0.0
    %290 = vmatpush1.msra.mxu0 0.0
    %291 = vmatprep.subr.mxu0 0.0
    %292 = vmatpush1.msra.mxu0 0.0
    %293 = vmatprep.subr.mxu0 0.0
    %294 = vmatpush1.msra.mxu0 0.0
    %295 = vmatprep.subr.mxu0 0.0
    %296 = vmatpush1.msra.mxu0 0.0
    %297 = vmatprep.subr.mxu0 0.0
    %298 = vmatpush1.msra.mxu0 0.0
    %299 = vmatprep.subr.mxu0 0.0
    %300 = vmatpush1.msra.mxu0 0.0
    %301 = vmatprep.subr.mxu0 0.0
    %302 = vmatpush1.msra.mxu0 0.0
    %303 = vmatprep.subr.mxu0 0.0
    %304 = vmatpush1.msra.mxu0 0.0
    %305 = vmatprep.subr.mxu0 0.0
    %306 = vmatpush1.msra.mxu0 0.0
    %307 = vmatprep.mubr.f32.mxu0 0.0
    %v308 = vand.u32 %v55, 4294901760
    %309 = vmatmul.mubr.f32.gmra.mrb[0].mxu0 %v308
    %v310 = vpop.f32.mrb[0].mxu0
    %v311 = vadd.f32 %v160, %v310
    %v312 = vpop.f32.mrb[0].mxu0
    %313 = vdwg.mxu0
    %314 = vmatprep.subr.mxu0 0.0
    %v315 = vand.u32 %v56, 4294901760
    %v316 = vsub.f32 %v56, %v315
    %317 = vmatpush1.msra.mxu0 %v316
    %318 = vmatprep.subr.mxu0 0.0
    %v319 = vand.u32 %v57, 4294901760
    %v320 = vsub.f32 %v57, %v319
    %321 = vmatpush1.msra.mxu0 %v320
    %322 = vmatprep.subr.mxu0 0.0
    %v323 = vand.u32 %v58, 4294901760
    %v324 = vsub.f32 %v58, %v323
    %325 = vmatpush1.msra.mxu0 %v324
    %326 = vmatprep.subr.mxu0 0.0
    %v327 = vand.u32 %v59, 4294901760
    %v328 = vsub.f32 %v59, %v327
    %329 = vmatpush1.msra.mxu0 %v328
    %330 = vmatprep.subr.mxu0 0.0
    %v331 = vand.u32 %v60, 4294901760
    %v332 = vsub.f32 %v60, %v331
    %333 = vmatpush1.msra.mxu0 %v332
    %334 = vmatprep.subr.mxu0 0.0
    %v335 = vand.u32 %v61, 4294901760
    %v336 = vsub.f32 %v61, %v335
    %337 = vmatpush1.msra.mxu0 %v336
    %338 = vmatprep.subr.mxu0 0.0
    %v339 = vand.u32 %v62, 4294901760
    %v340 = vsub.f32 %v62, %v339
    %341 = vmatpush1.msra.mxu0 %v340
    %342 = vmatprep.subr.mxu0 0.0
    %v343 = vand.u32 %v63, 4294901760
    %v344 = vsub.f32 %v63, %v343
    %345 = vmatpush1.msra.mxu0 %v344
    %346 = vmatprep.subr.mxu0 0.0
    %v347 = vand.u32 %v64, 4294901760
    %v348 = vsub.f32 %v64, %v347
    %349 = vmatpush1.msra.mxu0 %v348
    %350 = vmatprep.subr.mxu0 0.0
    %v351 = vand.u32 %v65, 4294901760
    %v352 = vsub.f32 %v65, %v351
    %353 = vmatpush1.msra.mxu0 %v352
    %354 = vmatprep.subr.mxu0 0.0
    %v355 = vand.u32 %v66, 4294901760
    %v356 = vsub.f32 %v66, %v355
    %357 = vmatpush1.msra.mxu0 %v356
    %358 = vmatprep.subr.mxu0 0.0
    %v359 = vand.u32 %v67, 4294901760
    %v360 = vsub.f32 %v67, %v359
    %361 = vmatpush1.msra.mxu0 %v360
    %362 = vmatprep.subr.mxu0 0.0
    %v363 = vand.u32 %v68, 4294901760
    %v364 = vsub.f32 %v68, %v363
    %365 = vmatpush1.msra.mxu0 %v364
    %366 = vmatprep.subr.mxu0 0.0
    %v367 = vand.u32 %v69, 4294901760
    %v368 = vsub.f32 %v69, %v367
    %369 = vmatpush1.msra.mxu0 %v368
    %370 = vmatprep.subr.mxu0 0.0
    %v371 = vand.u32 %v70, 4294901760
    %v372 = vsub.f32 %v70, %v371
    %373 = vmatpush1.msra.mxu0 %v372
    %374 = vmatprep.subr.mxu0 0.0
    %v375 = vand.u32 %v71, 4294901760
    %v376 = vsub.f32 %v71, %v375
    %377 = vmatpush1.msra.mxu0 %v376
    %378 = vmatprep.subr.mxu0 0.0
    %379 = vmatpush1.msra.mxu0 0.0
    %380 = vmatprep.subr.mxu0 0.0
    %381 = vmatpush1.msra.mxu0 0.0
    %382 = vmatprep.subr.mxu0 0.0
    %383 = vmatpush1.msra.mxu0 0.0
    %384 = vmatprep.subr.mxu0 0.0
    %385 = vmatpush1.msra.mxu0 0.0
    %386 = vmatprep.subr.mxu0 0.0
    %387 = vmatpush1.msra.mxu0 0.0
    %388 = vmatprep.subr.mxu0 0.0
    %389 = vmatpush1.msra.mxu0 0.0
    %390 = vmatprep.subr.mxu0 0.0
    %391 = vmatpush1.msra.mxu0 0.0
    %392 = vmatprep.subr.mxu0 0.0
    %393 = vmatpush1.msra.mxu0 0.0
    %394 = vmatprep.subr.mxu0 0.0
    %395 = vmatpush1.msra.mxu0 0.0
    %396 = vmatprep.subr.mxu0 0.0
    %397 = vmatpush1.msra.mxu0 0.0
    %398 = vmatprep.subr.mxu0 0.0
    %399 = vmatpush1.msra.mxu0 0.0
    %400 = vmatprep.subr.mxu0 0.0
    %401 = vmatpush1.msra.mxu0 0.0
    %402 = vmatprep.subr.mxu0 0.0
    %403 = vmatpush1.msra.mxu0 0.0
    %404 = vmatprep.subr.mxu0 0.0
    %405 = vmatpush1.msra.mxu0 0.0
    %406 = vmatprep.subr.mxu0 0.0
    %407 = vmatpush1.msra.mxu0 0.0
    %408 = vmatprep.subr.mxu0 0.0
    %409 = vmatpush1.msra.mxu0 0.0
    %410 = vmatprep.mubr.f32.mxu0 0.0
    %v411 = vand.u32 %v55, 4294901760
    %v412 = vsub.f32 %v55, %v411
    %413 = vmatmul.mubr.f32.gmra.mrb[0].mxu0 %v412
    %v414 = vpop.f32.mrb[0].mxu0
    %v415 = vadd.f32 %v311, %v414
    %v416 = vpop.f32.mrb[0].mxu0
    %417 = vdwg.mxu0
    %418 = vmatprep.subr.mxu0 0.0
    %v419 = vand.u32 %v56, 4294901760
    %420 = vmatpush1.msra.mxu0 %v419
    %421 = vmatprep.subr.mxu0 0.0
    %v422 = vand.u32 %v57, 4294901760
    %423 = vmatpush1.msra.mxu0 %v422
    %424 = vmatprep.subr.mxu0 0.0
    %v425 = vand.u32 %v58, 4294901760
    %426 = vmatpush1.msra.mxu0 %v425
    %427 = vmatprep.subr.mxu0 0.0
    %v428 = vand.u32 %v59, 4294901760
    %429 = vmatpush1.msra.mxu0 %v428
    %430 = vmatprep.subr.mxu0 0.0
    %v431 = vand.u32 %v60, 4294901760
    %432 = vmatpush1.msra.mxu0 %v431
    %433 = vmatprep.subr.mxu0 0.0
    %v434 = vand.u32 %v61, 4294901760
    %435 = vmatpush1.msra.mxu0 %v434
    %436 = vmatprep.subr.mxu0 0.0
    %v437 = vand.u32 %v62, 4294901760
    %438 = vmatpush1.msra.mxu0 %v437
    %439 = vmatprep.subr.mxu0 0.0
    %v440 = vand.u32 %v63, 4294901760
    %441 = vmatpush1.msra.mxu0 %v440
    %442 = vmatprep.subr.mxu0 0.0
    %v443 = vand.u32 %v64, 4294901760
    %444 = vmatpush1.msra.mxu0 %v443
    %445 = vmatprep.subr.mxu0 0.0
    %v446 = vand.u32 %v65, 4294901760
    %447 = vmatpush1.msra.mxu0 %v446
    %448 = vmatprep.subr.mxu0 0.0
    %v449 = vand.u32 %v66, 4294901760
    %450 = vmatpush1.msra.mxu0 %v449
    %451 = vmatprep.subr.mxu0 0.0
    %v452 = vand.u32 %v67, 4294901760
    %453 = vmatpush1.msra.mxu0 %v452
    %454 = vmatprep.subr.mxu0 0.0
    %v455 = vand.u32 %v68, 4294901760
    %456 = vmatpush1.msra.mxu0 %v455
    %457 = vmatprep.subr.mxu0 0.0
    %v458 = vand.u32 %v69, 4294901760
    %459 = vmatpush1.msra.mxu0 %v458
    %460 = vmatprep.subr.mxu0 0.0
    %v461 = vand.u32 %v70, 4294901760
    %462 = vmatpush1.msra.mxu0 %v461
    %463 = vmatprep.subr.mxu0 0.0
    %v464 = vand.u32 %v71, 4294901760
    %465 = vmatpush1.msra.mxu0 %v464
    %466 = vmatprep.subr.mxu0 0.0
    %467 = vmatpush1.msra.mxu0 0.0
    %468 = vmatprep.subr.mxu0 0.0
    %469 = vmatpush1.msra.mxu0 0.0
    %470 = vmatprep.subr.mxu0 0.0
    %471 = vmatpush1.msra.mxu0 0.0
    %472 = vmatprep.subr.mxu0 0.0
    %473 = vmatpush1.msra.mxu0 0.0
    %474 = vmatprep.subr.mxu0 0.0
    %475 = vmatpush1.msra.mxu0 0.0
    %476 = vmatprep.subr.mxu0 0.0
    %477 = vmatpush1.msra.mxu0 0.0
    %478 = vmatprep.subr.mxu0 0.0
    %479 = vmatpush1.msra.mxu0 0.0
    %480 = vmatprep.subr.mxu0 0.0
    %481 = vmatpush1.msra.mxu0 0.0
    %482 = vmatprep.subr.mxu0 0.0
    %483 = vmatpush1.msra.mxu0 0.0
    %484 = vmatprep.subr.mxu0 0.0
    %485 = vmatpush1.msra.mxu0 0.0
    %486 = vmatprep.subr.mxu0 0.0
    %487 = vmatpush1.msra.mxu0 0.0
    %488 = vmatprep.subr.mxu0 0.0
    %489 = vmatpush1.msra.mxu0 0.0
    %490 = vmatprep.subr.mxu0 0.0
    %491 = vmatpush1.msra.mxu0 0.0
    %492 = vmatprep.subr.mxu0 0.0
    %493 = vmatpush1.msra.mxu0 0.0
    %494 = vmatprep.subr.mxu0 0.0
    %495 = vmatpush1.msra.mxu0 0.0
    %496 = vmatprep.subr.mxu0 0.0
    %497 = vmatpush1.msra.mxu0 0.0
    %498 = vmatprep.mubr.f32.mxu0 0.0
    %v499 = vand.u32 %v55, 4294901760
    %v500 = vsub.f32 %v55, %v499
    %v501 = vand.u32 %v500, 4294901760
    %502 = vmatmul.mubr.f32.gmra.mrb[0].mxu0 %v501
    %v503 = vpop.f32.mrb[0].mxu0
    %v504 = vadd.f32 %v415, %v503
    %v505 = vpop.f32.mrb[0].mxu0
    %506 = vdwg.mxu0
    %507 = vmatprep.subr.mxu0 0.0
    %v508 = vand.u32 %v56, 4294901760
    %v509 = vsub.f32 %v56, %v508
    %v510 = vand.u32 %v509, 4294901760
    %511 = vmatpush1.msra.mxu0 %v510
    %512 = vmatprep.subr.mxu0 0.0
    %v513 = vand.u32 %v57, 4294901760
    %v514 = vsub.f32 %v57, %v513
    %v515 = vand.u32 %v514, 4294901760
    %516 = vmatpush1.msra.mxu0 %v515
    %517 = vmatprep.subr.mxu0 0.0
    %v518 = vand.u32 %v58, 4294901760
    %v519 = vsub.f32 %v58, %v518
    %v520 = vand.u32 %v519, 4294901760
    %521 = vmatpush1.msra.mxu0 %v520
    %522 = vmatprep.subr.mxu0 0.0
    %v523 = vand.u32 %v59, 4294901760
    %v524 = vsub.f32 %v59, %v523
    %v525 = vand.u32 %v524, 4294901760
    %526 = vmatpush1.msra.mxu0 %v525
    %527 = vmatprep.subr.mxu0 0.0
    %v528 = vand.u32 %v60, 4294901760
    %v529 = vsub.f32 %v60, %v528
    %v530 = vand.u32 %v529, 4294901760
    %531 = vmatpush1.msra.mxu0 %v530
    %532 = vmatprep.subr.mxu0 0.0
    %v533 = vand.u32 %v61, 4294901760
    %v534 = vsub.f32 %v61, %v533
    %v535 = vand.u32 %v534, 4294901760
    %536 = vmatpush1.msra.mxu0 %v535
    %537 = vmatprep.subr.mxu0 0.0
    %v538 = vand.u32 %v62, 4294901760
    %v539 = vsub.f32 %v62, %v538
    %v540 = vand.u32 %v539, 4294901760
    %541 = vmatpush1.msra.mxu0 %v540
    %542 = vmatprep.subr.mxu0 0.0
    %v543 = vand.u32 %v63, 4294901760
    %v544 = vsub.f32 %v63, %v543
    %v545 = vand.u32 %v544, 4294901760
    %546 = vmatpush1.msra.mxu0 %v545
    %547 = vmatprep.subr.mxu0 0.0
    %v548 = vand.u32 %v64, 4294901760
    %v549 = vsub.f32 %v64, %v548
    %v550 = vand.u32 %v549, 4294901760
    %551 = vmatpush1.msra.mxu0 %v550
    %552 = vmatprep.subr.mxu0 0.0
    %v553 = vand.u32 %v65, 4294901760
    %v554 = vsub.f32 %v65, %v553
    %v555 = vand.u32 %v554, 4294901760
    %556 = vmatpush1.msra.mxu0 %v555
    %557 = vmatprep.subr.mxu0 0.0
    %v558 = vand.u32 %v66, 4294901760
    %v559 = vsub.f32 %v66, %v558
    %v560 = vand.u32 %v559, 4294901760
    %561 = vmatpush1.msra.mxu0 %v560
    %562 = vmatprep.subr.mxu0 0.0
    %v563 = vand.u32 %v67, 4294901760
    %v564 = vsub.f32 %v67, %v563
    %v565 = vand.u32 %v564, 4294901760
    %566 = vmatpush1.msra.mxu0 %v565
    %567 = vmatprep.subr.mxu0 0.0
    %v568 = vand.u32 %v68, 4294901760
    %v569 = vsub.f32 %v68, %v568
    %v570 = vand.u32 %v569, 4294901760
    %571 = vmatpush1.msra.mxu0 %v570
    %572 = vmatprep.subr.mxu0 0.0
    %v573 = vand.u32 %v69, 4294901760
    %v574 = vsub.f32 %v69, %v573
    %v575 = vand.u32 %v574, 4294901760
    %576 = vmatpush1.msra.mxu0 %v575
    %577 = vmatprep.subr.mxu0 0.0
    %v578 = vand.u32 %v70, 4294901760
    %v579 = vsub.f32 %v70, %v578
    %v580 = vand.u32 %v579, 4294901760
    %581 = vmatpush1.msra.mxu0 %v580
    %582 = vmatprep.subr.mxu0 0.0
    %v583 = vand.u32 %v71, 4294901760
    %v584 = vsub.f32 %v71, %v583
    %v585 = vand.u32 %v584, 4294901760
    %586 = vmatpush1.msra.mxu0 %v585
    %587 = vmatprep.subr.mxu0 0.0
    %588 = vmatpush1.msra.mxu0 0.0
    %589 = vmatprep.subr.mxu0 0.0
    %590 = vmatpush1.msra.mxu0 0.0
    %591 = vmatprep.subr.mxu0 0.0
    %592 = vmatpush1.msra.mxu0 0.0
    %593 = vmatprep.subr.mxu0 0.0
    %594 = vmatpush1.msra.mxu0 0.0
    %595 = vmatprep.subr.mxu0 0.0
    %596 = vmatpush1.msra.mxu0 0.0
    %597 = vmatprep.subr.mxu0 0.0
    %598 = vmatpush1.msra.mxu0 0.0
    %599 = vmatprep.subr.mxu0 0.0
    %600 = vmatpush1.msra.mxu0 0.0
    %601 = vmatprep.subr.mxu0 0.0
    %602 = vmatpush1.msra.mxu0 0.0
    %603 = vmatprep.subr.mxu0 0.0
    %604 = vmatpush1.msra.mxu0 0.0
    %605 = vmatprep.subr.mxu0 0.0
    %606 = vmatpush1.msra.mxu0 0.0
    %607 = vmatprep.subr.mxu0 0.0
    %608 = vmatpush1.msra.mxu0 0.0
    %609 = vmatprep.subr.mxu0 0.0
    %610 = vmatpush1.msra.mxu0 0.0
    %611 = vmatprep.subr.mxu0 0.0
    %612 = vmatpush1.msra.mxu0 0.0
    %613 = vmatprep.subr.mxu0 0.0
    %614 = vmatpush1.msra.mxu0 0.0
    %615 = vmatprep.subr.mxu0 0.0
    %616 = vmatpush1.msra.mxu0 0.0
    %617 = vmatprep.subr.mxu0 0.0
    %618 = vmatpush1.msra.mxu0 0.0
    %619 = vmatprep.mubr.f32.mxu0 0.0
    %v620 = vand.u32 %v55, 4294901760
    %621 = vmatmul.mubr.f32.gmra.mrb[0].mxu0 %v620
    %v622 = vpop.f32.mrb[0].mxu0
    %v623 = vadd.f32 %v504, %v622
    %v624 = vpop.f32.mrb[0].mxu0
    %625 = vdwg.mxu0
    %626 = vmatprep.subr.mxu0 0.0
    %v627 = vand.u32 %v56, 4294901760
    %628 = vmatpush1.msra.mxu0 %v627
    %629 = vmatprep.subr.mxu0 0.0
    %v630 = vand.u32 %v57, 4294901760
    %631 = vmatpush1.msra.mxu0 %v630
    %632 = vmatprep.subr.mxu0 0.0
    %v633 = vand.u32 %v58, 4294901760
    %634 = vmatpush1.msra.mxu0 %v633
    %635 = vmatprep.subr.mxu0 0.0
    %v636 = vand.u32 %v59, 4294901760
    %637 = vmatpush1.msra.mxu0 %v636
    %638 = vmatprep.subr.mxu0 0.0
    %v639 = vand.u32 %v60, 4294901760
    %640 = vmatpush1.msra.mxu0 %v639
    %641 = vmatprep.subr.mxu0 0.0
    %v642 = vand.u32 %v61, 4294901760
    %643 = vmatpush1.msra.mxu0 %v642
    %644 = vmatprep.subr.mxu0 0.0
    %v645 = vand.u32 %v62, 4294901760
    %646 = vmatpush1.msra.mxu0 %v645
    %647 = vmatprep.subr.mxu0 0.0
    %v648 = vand.u32 %v63, 4294901760
    %649 = vmatpush1.msra.mxu0 %v648
    %650 = vmatprep.subr.mxu0 0.0
    %v651 = vand.u32 %v64, 4294901760
    %652 = vmatpush1.msra.mxu0 %v651
    %653 = vmatprep.subr.mxu0 0.0
    %v654 = vand.u32 %v65, 4294901760
    %655 = vmatpush1.msra.mxu0 %v654
    %656 = vmatprep.subr.mxu0 0.0
    %v657 = vand.u32 %v66, 4294901760
    %658 = vmatpush1.msra.mxu0 %v657
    %659 = vmatprep.subr.mxu0 0.0
    %v660 = vand.u32 %v67, 4294901760
    %661 = vmatpush1.msra.mxu0 %v660
    %662 = vmatprep.subr.mxu0 0.0
    %v663 = vand.u32 %v68, 4294901760
    %664 = vmatpush1.msra.mxu0 %v663
    %665 = vmatprep.subr.mxu0 0.0
    %v666 = vand.u32 %v69, 4294901760
    %667 = vmatpush1.msra.mxu0 %v666
    %668 = vmatprep.subr.mxu0 0.0
    %v669 = vand.u32 %v70, 4294901760
    %670 = vmatpush1.msra.mxu0 %v669
    %671 = vmatprep.subr.mxu0 0.0
    %v672 = vand.u32 %v71, 4294901760
    %673 = vmatpush1.msra.mxu0 %v672
    %674 = vmatprep.subr.mxu0 0.0
    %675 = vmatpush1.msra.mxu0 0.0
    %676 = vmatprep.subr.mxu0 0.0
    %677 = vmatpush1.msra.mxu0 0.0
    %678 = vmatprep.subr.mxu0 0.0
    %679 = vmatpush1.msra.mxu0 0.0
    %680 = vmatprep.subr.mxu0 0.0
    %681 = vmatpush1.msra.mxu0 0.0
    %682 = vmatprep.subr.mxu0 0.0
    %683 = vmatpush1.msra.mxu0 0.0
    %684 = vmatprep.subr.mxu0 0.0
    %685 = vmatpush1.msra.mxu0 0.0
    %686 = vmatprep.subr.mxu0 0.0
    %687 = vmatpush1.msra.mxu0 0.0
    %688 = vmatprep.subr.mxu0 0.0
    %689 = vmatpush1.msra.mxu0 0.0
    %690 = vmatprep.subr.mxu0 0.0
    %691 = vmatpush1.msra.mxu0 0.0
    %692 = vmatprep.subr.mxu0 0.0
    %693 = vmatpush1.msra.mxu0 0.0
    %694 = vmatprep.subr.mxu0 0.0
    %695 = vmatpush1.msra.mxu0 0.0
    %696 = vmatprep.subr.mxu0 0.0
    %697 = vmatpush1.msra.mxu0 0.0
    %698 = vmatprep.subr.mxu0 0.0
    %699 = vmatpush1.msra.mxu0 0.0
    %700 = vmatprep.subr.mxu0 0.0
    %701 = vmatpush1.msra.mxu0 0.0
    %702 = vmatprep.subr.mxu0 0.0
    %703 = vmatpush1.msra.mxu0 0.0
    %704 = vmatprep.subr.mxu0 0.0
    %705 = vmatpush1.msra.mxu0 0.0
    %706 = vmatprep.mubr.f32.mxu0 0.0
    %v707 = vand.u32 %v55, 4294901760
    %708 = vmatmul.mubr.f32.gmra.mrb[0].mxu0 %v707
    %v709 = vpop.f32.mrb[0].mxu0
    %v710 = vadd.f32 %v623, %v709
    %v711 = vpop.f32.mrb[0].mxu0
    %712 = vdwg.mxu0
    %v713 = vrsqrt.pop %v710
    %v714 = vld [vmem:[#allocation7] sm:$0xff]
    %v715 = vld [vmem:[#allocation7 + $0x8] sm:$0xff]
    %vm716 = vcmask 130048
    %v718 = vsel %vm716, %v713, 0
    %720 = vmatprep.subr.mxu0 0.0
    %v721 = vand.u32 %v714, 4294901760
    %722 = vmatpush1.msra.mxu0 %v721
    %723 = vmatprep.subr.mxu0 0.0
    %v724 = vand.u32 %v715, 4294901760
    %725 = vmatpush1.msra.mxu0 %v724
    %726 = vmatprep.subr.mxu0 0.0
    %727 = vmatpush1.msra.mxu0 0.0
    %728 = vmatprep.subr.mxu0 0.0
    %729 = vmatpush1.msra.mxu0 0.0
    %730 = vmatprep.subr.mxu0 0.0
    %731 = vmatpush1.msra.mxu0 0.0
    %732 = vmatprep.subr.mxu0 0.0
    %733 = vmatpush1.msra.mxu0 0.0
    %734 = vmatprep.subr.mxu0 0.0
    %735 = vmatpush1.msra.mxu0 0.0
    %736 = vmatprep.subr.mxu0 0.0
    %737 = vmatpush1.msra.mxu0 0.0
    %738 = vmatprep.subr.mxu0 0.0
    %739 = vmatpush1.msra.mxu0 0.0
    %740 = vmatprep.subr.mxu0 0.0
    %741 = vmatpush1.msra.mxu0 0.0
    %742 = vmatprep.subr.mxu0 0.0
    %743 = vmatpush1.msra.mxu0 0.0
    %744 = vmatprep.subr.mxu0 0.0
    %745 = vmatpush1.msra.mxu0 0.0
    %746 = vmatprep.subr.mxu0 0.0
    %747 = vmatpush1.msra.mxu0 0.0
    %748 = vmatprep.subr.mxu0 0.0
    %749 = vmatpush1.msra.mxu0 0.0
    %750 = vmatprep.subr.mxu0 0.0
    %751 = vmatpush1.msra.mxu0 0.0
    %752 = vmatprep.subr.mxu0 0.0
    %753 = vmatpush1.msra.mxu0 0.0
    %754 = vmatprep.subr.mxu0 0.0
    %755 = vmatpush1.msra.mxu0 0.0
    %756 = vmatprep.subr.mxu0 0.0
    %757 = vmatpush1.msra.mxu0 0.0
    %758 = vmatprep.subr.mxu0 0.0
    %759 = vmatpush1.msra.mxu0 0.0
    %760 = vmatprep.subr.mxu0 0.0
    %761 = vmatpush1.msra.mxu0 0.0
    %762 = vmatprep.subr.mxu0 0.0
    %763 = vmatpush1.msra.mxu0 0.0
    %764 = vmatprep.subr.mxu0 0.0
    %765 = vmatpush1.msra.mxu0 0.0
    %766 = vmatprep.subr.mxu0 0.0
    %767 = vmatpush1.msra.mxu0 0.0
    %768 = vmatprep.subr.mxu0 0.0
    %769 = vmatpush1.msra.mxu0 0.0
    %770 = vmatprep.subr.mxu0 0.0
    %771 = vmatpush1.msra.mxu0 0.0
    %772 = vmatprep.subr.mxu0 0.0
    %773 = vmatpush1.msra.mxu0 0.0
    %774 = vmatprep.subr.mxu0 0.0
    %775 = vmatpush1.msra.mxu0 0.0
    %776 = vmatprep.subr.mxu0 0.0
    %777 = vmatpush1.msra.mxu0 0.0
    %778 = vmatprep.subr.mxu0 0.0
    %779 = vmatpush1.msra.mxu0 0.0
    %780 = vmatprep.subr.mxu0 0.0
    %781 = vmatpush1.msra.mxu0 0.0
    %782 = vmatprep.subr.mxu0 0.0
    %783 = vmatpush1.msra.mxu0 0.0
    %784 = vmatprep.subr.mxu0 0.0
    %785 = vmatpush1.msra.mxu0 0.0
    %786 = vmatprep.mubr.f32.mxu0 0.0
    %v787 = vand.u32 %v718, 4294901760
    %v788 = vsub.f32 %v718, %v787
    %v789 = vand.u32 %v788, 4294901760
    %v790 = vsub.f32 %v788, %v789
    %v791 = vand.u32 %v790, 4294901760
    %792 = vmatmul.mubr.f32.gmra.mrb[0].mxu0 %v791
    %v793 = vpop.f32.mrb[0].mxu0
    %v794 = vadd.f32 0.0, %v793
    %v795 = vpop.f32.mrb[0].mxu0
    %796 = vdwg.mxu0
    %797 = vmatprep.subr.mxu0 0.0
    %v798 = vand.u32 %v714, 4294901760
    %v799 = vsub.f32 %v714, %v798
    %v800 = vand.u32 %v799, 4294901760
    %v801 = vsub.f32 %v799, %v800
    %v802 = vand.u32 %v801, 4294901760
    %803 = vmatpush1.msra.mxu0 %v802
    %804 = vmatprep.subr.mxu0 0.0
    %v805 = vand.u32 %v715, 4294901760
    %v806 = vsub.f32 %v715, %v805
    %v807 = vand.u32 %v806, 4294901760
    %v808 = vsub.f32 %v806, %v807
    %v809 = vand.u32 %v808, 4294901760
    %810 = vmatpush1.msra.mxu0 %v809
    %811 = vmatprep.subr.mxu0 0.0
    %812 = vmatpush1.msra.mxu0 0.0
    %813 = vmatprep.subr.mxu0 0.0
    %814 = vmatpush1.msra.mxu0 0.0
    %815 = vmatprep.subr.mxu0 0.0
    %816 = vmatpush1.msra.mxu0 0.0
    %817 = vmatprep.subr.mxu0 0.0
    %818 = vmatpush1.msra.mxu0 0.0
    %819 = vmatprep.subr.mxu0 0.0
    %820 = vmatpush1.msra.mxu0 0.0
    %821 = vmatprep.subr.mxu0 0.0
    %822 = vmatpush1.msra.mxu0 0.0
    %823 = vmatprep.subr.mxu0 0.0
    %824 = vmatpush1.msra.mxu0 0.0
    %825 = vmatprep.subr.mxu0 0.0
    %826 = vmatpush1.msra.mxu0 0.0
    %827 = vmatprep.subr.mxu0 0.0
    %828 = vmatpush1.msra.mxu0 0.0
    %829 = vmatprep.subr.mxu0 0.0
    %830 = vmatpush1.msra.mxu0 0.0
    %831 = vmatprep.subr.mxu0 0.0
    %832 = vmatpush1.msra.mxu0 0.0
    %833 = vmatprep.subr.mxu0 0.0
    %834 = vmatpush1.msra.mxu0 0.0
    %835 = vmatprep.subr.mxu0 0.0
    %836 = vmatpush1.msra.mxu0 0.0
    %837 = vmatprep.subr.mxu0 0.0
    %838 = vmatpush1.msra.mxu0 0.0
    %839 = vmatprep.subr.mxu0 0.0
    %840 = vmatpush1.msra.mxu0 0.0
    %841 = vmatprep.subr.mxu0 0.0
    %842 = vmatpush1.msra.mxu0 0.0
    %843 = vmatprep.subr.mxu0 0.0
    %844 = vmatpush1.msra.mxu0 0.0
    %845 = vmatprep.subr.mxu0 0.0
    %846 = vmatpush1.msra.mxu0 0.0
    %847 = vmatprep.subr.mxu0 0.0
    %848 = vmatpush1.msra.mxu0 0.0
    %849 = vmatprep.subr.mxu0 0.0
    %850 = vmatpush1.msra.mxu0 0.0
    %851 = vmatprep.subr.mxu0 0.0
    %852 = vmatpush1.msra.mxu0 0.0
    %853 = vmatprep.subr.mxu0 0.0
    %854 = vmatpush1.msra.mxu0 0.0
    %855 = vmatprep.subr.mxu0 0.0
    %856 = vmatpush1.msra.mxu0 0.0
    %857 = vmatprep.subr.mxu0 0.0
    %858 = vmatpush1.msra.mxu0 0.0
    %859 = vmatprep.subr.mxu0 0.0
    %860 = vmatpush1.msra.mxu0 0.0
    %861 = vmatprep.subr.mxu0 0.0
    %862 = vmatpush1.msra.mxu0 0.0
    %863 = vmatprep.subr.mxu0 0.0
    %864 = vmatpush1.msra.mxu0 0.0
    %865 = vmatprep.subr.mxu0 0.0
    %866 = vmatpush1.msra.mxu0 0.0
    %867 = vmatprep.subr.mxu0 0.0
    %868 = vmatpush1.msra.mxu0 0.0
    %869 = vmatprep.subr.mxu0 0.0
    %870 = vmatpush1.msra.mxu0 0.0
    %871 = vmatprep.mubr.f32.mxu0 0.0
    %v872 = vand.u32 %v718, 4294901760
    %873 = vmatmul.mubr.f32.gmra.mrb[0].mxu0 %v872
    %v874 = vpop.f32.mrb[0].mxu0
    %v875 = vadd.f32 %v794, %v874
    %v876 = vpop.f32.mrb[0].mxu0
    %877 = vdwg.mxu0
    %878 = vmatprep.subr.mxu0 0.0
    %v879 = vand.u32 %v714, 4294901760
    %v880 = vsub.f32 %v714, %v879
    %881 = vmatpush1.msra.mxu0 %v880
    %882 = vmatprep.subr.mxu0 0.0
    %v883 = vand.u32 %v715, 4294901760
    %v884 = vsub.f32 %v715, %v883
    %885 = vmatpush1.msra.mxu0 %v884
    %886 = vmatprep.subr.mxu0 0.0
    %887 = vmatpush1.msra.mxu0 0.0
    %888 = vmatprep.subr.mxu0 0.0
    %889 = vmatpush1.msra.mxu0 0.0
    %890 = vmatprep.subr.mxu0 0.0
    %891 = vmatpush1.msra.mxu0 0.0
    %892 = vmatprep.subr.mxu0 0.0
    %893 = vmatpush1.msra.mxu0 0.0
    %894 = vmatprep.subr.mxu0 0.0
    %895 = vmatpush1.msra.mxu0 0.0
    %896 = vmatprep.subr.mxu0 0.0
    %897 = vmatpush1.msra.mxu0 0.0
    %898 = vmatprep.subr.mxu0 0.0
    %899 = vmatpush1.msra.mxu0 0.0
    %900 = vmatprep.subr.mxu0 0.0
    %901 = vmatpush1.msra.mxu0 0.0
    %902 = vmatprep.subr.mxu0 0.0
    %903 = vmatpush1.msra.mxu0 0.0
    %904 = vmatprep.subr.mxu0 0.0
    %905 = vmatpush1.msra.mxu0 0.0
    %906 = vmatprep.subr.mxu0 0.0
    %907 = vmatpush1.msra.mxu0 0.0
    %908 = vmatprep.subr.mxu0 0.0
    %909 = vmatpush1.msra.mxu0 0.0
    %910 = vmatprep.subr.mxu0 0.0
    %911 = vmatpush1.msra.mxu0 0.0
    %912 = vmatprep.subr.mxu0 0.0
    %913 = vmatpush1.msra.mxu0 0.0
    %914 = vmatprep.subr.mxu0 0.0
    %915 = vmatpush1.msra.mxu0 0.0
    %916 = vmatprep.subr.mxu0 0.0
    %917 = vmatpush1.msra.mxu0 0.0
    %918 = vmatprep.subr.mxu0 0.0
    %919 = vmatpush1.msra.mxu0 0.0
    %920 = vmatprep.subr.mxu0 0.0
    %921 = vmatpush1.msra.mxu0 0.0
    %922 = vmatprep.subr.mxu0 0.0
    %923 = vmatpush1.msra.mxu0 0.0
    %924 = vmatprep.subr.mxu0 0.0
    %925 = vmatpush1.msra.mxu0 0.0
    %926 = vmatprep.subr.mxu0 0.0
    %927 = vmatpush1.msra.mxu0 0.0
    %928 = vmatprep.subr.mxu0 0.0
    %929 = vmatpush1.msra.mxu0 0.0
    %930 = vmatprep.subr.mxu0 0.0
    %931 = vmatpush1.msra.mxu0 0.0
    %932 = vmatprep.subr.mxu0 0.0
    %933 = vmatpush1.msra.mxu0 0.0
    %934 = vmatprep.subr.mxu0 0.0
    %935 = vmatpush1.msra.mxu0 0.0
    %936 = vmatprep.subr.mxu0 0.0
    %937 = vmatpush1.msra.mxu0 0.0
    %938 = vmatprep.subr.mxu0 0.0
    %939 = vmatpush1.msra.mxu0 0.0
    %940 = vmatprep.subr.mxu0 0.0
    %941 = vmatpush1.msra.mxu0 0.0
    %942 = vmatprep.subr.mxu0 0.0
    %943 = vmatpush1.msra.mxu0 0.0
    %944 = vmatprep.subr.mxu0 0.0
    %945 = vmatpush1.msra.mxu0 0.0
    %946 = vmatprep.mubr.f32.mxu0 0.0
    %v947 = vand.u32 %v718, 4294901760
    %v948 = vsub.f32 %v718, %v947
    %949 = vmatmul.mubr.f32.gmra.mrb[0].mxu0 %v948
    %v950 = vpop.f32.mrb[0].mxu0
    %v951 = vadd.f32 %v875, %v950
    %v952 = vpop.f32.mrb[0].mxu0
    %953 = vdwg.mxu0
    %954 = vmatprep.subr.mxu0 0.0
    %v955 = vand.u32 %v714, 4294901760
    %956 = vmatpush1.msra.mxu0 %v955
    %957 = vmatprep.subr.mxu0 0.0
    %v958 = vand.u32 %v715, 4294901760
    %959 = vmatpush1.msra.mxu0 %v958
    %960 = vmatprep.subr.mxu0 0.0
    %961 = vmatpush1.msra.mxu0 0.0
    %962 = vmatprep.subr.mxu0 0.0
    %963 = vmatpush1.msra.mxu0 0.0
    %964 = vmatprep.subr.mxu0 0.0
    %965 = vmatpush1.msra.mxu0 0.0
    %966 = vmatprep.subr.mxu0 0.0
    %967 = vmatpush1.msra.mxu0 0.0
    %968 = vmatprep.subr.mxu0 0.0
    %969 = vmatpush1.msra.mxu0 0.0
    %970 = vmatprep.subr.mxu0 0.0
    %971 = vmatpush1.msra.mxu0 0.0
    %972 = vmatprep.subr.mxu0 0.0
    %973 = vmatpush1.msra.mxu0 0.0
    %974 = vmatprep.subr.mxu0 0.0
    %975 = vmatpush1.msra.mxu0 0.0
    %976 = vmatprep.subr.mxu0 0.0
    %977 = vmatpush1.msra.mxu0 0.0
    %978 = vmatprep.subr.mxu0 0.0
    %979 = vmatpush1.msra.mxu0 0.0
    %980 = vmatprep.subr.mxu0 0.0
    %981 = vmatpush1.msra.mxu0 0.0
    %982 = vmatprep.subr.mxu0 0.0
    %983 = vmatpush1.msra.mxu0 0.0
    %984 = vmatprep.subr.mxu0 0.0
    %985 = vmatpush1.msra.mxu0 0.0
    %986 = vmatprep.subr.mxu0 0.0
    %987 = vmatpush1.msra.mxu0 0.0
    %988 = vmatprep.subr.mxu0 0.0
    %989 = vmatpush1.msra.mxu0 0.0
    %990 = vmatprep.subr.mxu0 0.0
    %991 = vmatpush1.msra.mxu0 0.0
    %992 = vmatprep.subr.mxu0 0.0
    %993 = vmatpush1.msra.mxu0 0.0
    %994 = vmatprep.subr.mxu0 0.0
    %995 = vmatpush1.msra.mxu0 0.0
    %996 = vmatprep.subr.mxu0 0.0
    %997 = vmatpush1.msra.mxu0 0.0
    %998 = vmatprep.subr.mxu0 0.0
    %999 = vmatpush1.msra.mxu0 0.0
    %1000 = vmatprep.subr.mxu0 0.0
    %1001 = vmatpush1.msra.mxu0 0.0
    %1002 = vmatprep.subr.mxu0 0.0
    %1003 = vmatpush1.msra.mxu0 0.0
    %1004 = vmatprep.subr.mxu0 0.0
    %1005 = vmatpush1.msra.mxu0 0.0
    %1006 = vmatprep.subr.mxu0 0.0
    %1007 = vmatpush1.msra.mxu0 0.0
    %1008 = vmatprep.subr.mxu0 0.0
    %1009 = vmatpush1.msra.mxu0 0.0
    %1010 = vmatprep.subr.mxu0 0.0
    %1011 = vmatpush1.msra.mxu0 0.0
    %1012 = vmatprep.subr.mxu0 0.0
    %1013 = vmatpush1.msra.mxu0 0.0
    %1014 = vmatprep.subr.mxu0 0.0
    %1015 = vmatpush1.msra.mxu0 0.0
    %1016 = vmatprep.subr.mxu0 0.0
    %1017 = vmatpush1.msra.mxu0 0.0
    %1018 = vmatprep.subr.mxu0 0.0
    %1019 = vmatpush1.msra.mxu0 0.0
    %1020 = vmatprep.mubr.f32.mxu0 0.0
    %v1021 = vand.u32 %v718, 4294901760
    %v1022 = vsub.f32 %v718, %v1021
    %v1023 = vand.u32 %v1022, 4294901760
    %1024 = vmatmul.mubr.f32.gmra.mrb[0].mxu0 %v1023
    %v1025 = vpop.f32.mrb[0].mxu0
    %v1026 = vadd.f32 %v951, %v1025
    %v1027 = vpop.f32.mrb[0].mxu0
    %1028 = vdwg.mxu0
    %1029 = vmatprep.subr.mxu0 0.0
    %v1030 = vand.u32 %v714, 4294901760
    %v1031 = vsub.f32 %v714, %v1030
    %v1032 = vand.u32 %v1031, 4294901760
    %1033 = vmatpush1.msra.mxu0 %v1032
    %1034 = vmatprep.subr.mxu0 0.0
    %v1035 = vand.u32 %v715, 4294901760
    %v1036 = vsub.f32 %v715, %v1035
    %v1037 = vand.u32 %v1036, 4294901760
    %1038 = vmatpush1.msra.mxu0 %v1037
    %1039 = vmatprep.subr.mxu0 0.0
    %1040 = vmatpush1.msra.mxu0 0.0
    %1041 = vmatprep.subr.mxu0 0.0
    %1042 = vmatpush1.msra.mxu0 0.0
    %1043 = vmatprep.subr.mxu0 0.0
    %1044 = vmatpush1.msra.mxu0 0.0
    %1045 = vmatprep.subr.mxu0 0.0
    %1046 = vmatpush1.msra.mxu0 0.0
    %1047 = vmatprep.subr.mxu0 0.0
    %1048 = vmatpush1.msra.mxu0 0.0
    %1049 = vmatprep.subr.mxu0 0.0
    %1050 = vmatpush1.msra.mxu0 0.0
    %1051 = vmatprep.subr.mxu0 0.0
    %1052 = vmatpush1.msra.mxu0 0.0
    %1053 = vmatprep.subr.mxu0 0.0
    %1054 = vmatpush1.msra.mxu0 0.0
    %1055 = vmatprep.subr.mxu0 0.0
    %1056 = vmatpush1.msra.mxu0 0.0
    %1057 = vmatprep.subr.mxu0 0.0
    %1058 = vmatpush1.msra.mxu0 0.0
    %1059 = vmatprep.subr.mxu0 0.0
    %1060 = vmatpush1.msra.mxu0 0.0
    %1061 = vmatprep.subr.mxu0 0.0
    %1062 = vmatpush1.msra.mxu0 0.0
    %1063 = vmatprep.subr.mxu0 0.0
    %1064 = vmatpush1.msra.mxu0 0.0
    %1065 = vmatprep.subr.mxu0 0.0
    %1066 = vmatpush1.msra.mxu0 0.0
    %1067 = vmatprep.subr.mxu0 0.0
    %1068 = vmatpush1.msra.mxu0 0.0
    %1069 = vmatprep.subr.mxu0 0.0
    %1070 = vmatpush1.msra.mxu0 0.0
    %1071 = vmatprep.subr.mxu0 0.0
    %1072 = vmatpush1.msra.mxu0 0.0
    %1073 = vmatprep.subr.mxu0 0.0
    %1074 = vmatpush1.msra.mxu0 0.0
    %1075 = vmatprep.subr.mxu0 0.0
    %1076 = vmatpush1.msra.mxu0 0.0
    %1077 = vmatprep.subr.mxu0 0.0
    %1078 = vmatpush1.msra.mxu0 0.0
    %1079 = vmatprep.subr.mxu0 0.0
    %1080 = vmatpush1.msra.mxu0 0.0
    %1081 = vmatprep.subr.mxu0 0.0
    %1082 = vmatpush1.msra.mxu0 0.0
    %1083 = vmatprep.subr.mxu0 0.0
    %1084 = vmatpush1.msra.mxu0 0.0
    %1085 = vmatprep.subr.mxu0 0.0
    %1086 = vmatpush1.msra.mxu0 0.0
    %1087 = vmatprep.subr.mxu0 0.0
    %1088 = vmatpush1.msra.mxu0 0.0
    %1089 = vmatprep.subr.mxu0 0.0
    %1090 = vmatpush1.msra.mxu0 0.0
    %1091 = vmatprep.subr.mxu0 0.0
    %1092 = vmatpush1.msra.mxu0 0.0
    %1093 = vmatprep.subr.mxu0 0.0
    %1094 = vmatpush1.msra.mxu0 0.0
    %1095 = vmatprep.subr.mxu0 0.0
    %1096 = vmatpush1.msra.mxu0 0.0
    %1097 = vmatprep.subr.mxu0 0.0
    %1098 = vmatpush1.msra.mxu0 0.0
    %1099 = vmatprep.mubr.f32.mxu0 0.0
    %v1100 = vand.u32 %v718, 4294901760
    %1101 = vmatmul.mubr.f32.gmra.mrb[0].mxu0 %v1100
    %v1102 = vpop.f32.mrb[0].mxu0
    %v1103 = vadd.f32 %v1026, %v1102
    %v1104 = vpop.f32.mrb[0].mxu0
    %1105 = vdwg.mxu0
    %1106 = vmatprep.subr.mxu0 0.0
    %v1107 = vand.u32 %v714, 4294901760
    %1108 = vmatpush1.msra.mxu0 %v1107
    %1109 = vmatprep.subr.mxu0 0.0
    %v1110 = vand.u32 %v715, 4294901760
    %1111 = vmatpush1.msra.mxu0 %v1110
    %1112 = vmatprep.subr.mxu0 0.0
    %1113 = vmatpush1.msra.mxu0 0.0
    %1114 = vmatprep.subr.mxu0 0.0
    %1115 = vmatpush1.msra.mxu0 0.0
    %1116 = vmatprep.subr.mxu0 0.0
    %1117 = vmatpush1.msra.mxu0 0.0
    %1118 = vmatprep.subr.mxu0 0.0
    %1119 = vmatpush1.msra.mxu0 0.0
    %1120 = vmatprep.subr.mxu0 0.0
    %1121 = vmatpush1.msra.mxu0 0.0
    %1122 = vmatprep.subr.mxu0 0.0
    %1123 = vmatpush1.msra.mxu0 0.0
    %1124 = vmatprep.subr.mxu0 0.0
    %1125 = vmatpush1.msra.mxu0 0.0
    %1126 = vmatprep.subr.mxu0 0.0
    %1127 = vmatpush1.msra.mxu0 0.0
    %1128 = vmatprep.subr.mxu0 0.0
    %1129 = vmatpush1.msra.mxu0 0.0
    %1130 = vmatprep.subr.mxu0 0.0
    %1131 = vmatpush1.msra.mxu0 0.0
    %1132 = vmatprep.subr.mxu0 0.0
    %1133 = vmatpush1.msra.mxu0 0.0
    %1134 = vmatprep.subr.mxu0 0.0
    %1135 = vmatpush1.msra.mxu0 0.0
    %1136 = vmatprep.subr.mxu0 0.0
    %1137 = vmatpush1.msra.mxu0 0.0
    %1138 = vmatprep.subr.mxu0 0.0
    %1139 = vmatpush1.msra.mxu0 0.0
    %1140 = vmatprep.subr.mxu0 0.0
    %1141 = vmatpush1.msra.mxu0 0.0
    %1142 = vmatprep.subr.mxu0 0.0
    %1143 = vmatpush1.msra.mxu0 0.0
    %1144 = vmatprep.subr.mxu0 0.0
    %1145 = vmatpush1.msra.mxu0 0.0
    %1146 = vmatprep.subr.mxu0 0.0
    %1147 = vmatpush1.msra.mxu0 0.0
    %1148 = vmatprep.subr.mxu0 0.0
    %1149 = vmatpush1.msra.mxu0 0.0
    %1150 = vmatprep.subr.mxu0 0.0
    %1151 = vmatpush1.msra.mxu0 0.0
    %1152 = vmatprep.subr.mxu0 0.0
    %1153 = vmatpush1.msra.mxu0 0.0
    %1154 = vmatprep.subr.mxu0 0.0
    %1155 = vmatpush1.msra.mxu0 0.0
    %1156 = vmatprep.subr.mxu0 0.0
    %1157 = vmatpush1.msra.mxu0 0.0
    %1158 = vmatprep.subr.mxu0 0.0
    %1159 = vmatpush1.msra.mxu0 0.0
    %1160 = vmatprep.subr.mxu0 0.0
    %1161 = vmatpush1.msra.mxu0 0.0
    %1162 = vmatprep.subr.mxu0 0.0
    %1163 = vmatpush1.msra.mxu0 0.0
    %1164 = vmatprep.subr.mxu0 0.0
    %1165 = vmatpush1.msra.mxu0 0.0
    %1166 = vmatprep.subr.mxu0 0.0
    %1167 = vmatpush1.msra.mxu0 0.0
    %1168 = vmatprep.subr.mxu0 0.0
    %1169 = vmatpush1.msra.mxu0 0.0
    %1170 = vmatprep.subr.mxu0 0.0
    %1171 = vmatpush1.msra.mxu0 0.0
    %1172 = vmatprep.mubr.f32.mxu0 0.0
    %v1173 = vand.u32 %v718, 4294901760
    %1174 = vmatmul.mubr.f32.gmra.mrb[0].mxu0 %v1173
    %v1175 = vpop.f32.mrb[0].mxu0
    %v1176 = vadd.f32 %v1103, %v1175
    %v1177 = vpop.f32.mrb[0].mxu0
    %1178 = vdwg.mxu0
    %v1179 = vmul.f32 %v54, %v1176
    %1180 = vst [vmem:[#allocation8] sm:$0xf] %v1179
    // Predicated region
    $region26: #{tpu_custom_call.1} parent=1 // pred_check
      _
    $region27: #{tpu_custom_call.1} parent=1 // pred_check_branch
      %1182 = sbr.rel (0) target = $region29
    $region28: #{tpu_custom_call.1} parent=1 // pred_region
      %s1184 = ssub.s32 64, 64
      %1185 = vsyncadd [#allocation4], %s1184
      %s1187 = sshll.u32 [#allocation8], 4
      %s1188 = int_to_ptr.vmem [resolvable:$true] %s1187
      %1190 = dma.vmem_to_hbm [thread:$0]  %s1188, 64, %s3, [#allocation4]
    $region29: #{tpu_custom_call.1} parent=1 // pred_fallthru
      _
    // Predicated region
    $region30: #{tpu_custom_call.1} parent=1 // pred_check
      _
    $region31: #{tpu_custom_call.1} parent=1 // pred_check_branch
      %1192 = sbr.rel (0) target = $region33
    $region32: #{tpu_custom_call.1} parent=1 // pred_region
      %1193 = dma.done [#allocation4], 64
    $region33: #{tpu_custom_call.1} parent=1 // pred_fallthru
      _
    %1194 = vsyncpa [#allocation3], 1
    %1195 = vsyncpa [#allocation6], 1
    %1196 = vsyncpa [#allocation4], 1

</llo_original>
